<compile_context>
chip_gen: v7x
topology: tpu7x:2x2x1
jax: 0.10.0
libtpu: 0.0.40
codegen_flags: <defaults>
</compile_context>

<pallas_src>
import jax
import jax.numpy as jnp
from jax.experimental import pallas as pl
from jax.experimental.pallas import tpu as pltpu


TM_MAX = 16384  # batch tile (lanes); sized so double-buffered tiles + activations << 32 MiB


def _round_up(a: int, m: int) -> int:
    return (a + m - 1) // m * m


def punn_kernel(x_ref, t_ref,
                w1_ref, b1_ref,
                w2_ref, b2_ref,
                w3_ref, b3_ref,
                w4_ref, b4_ref,
                o_ref):
    xv = x_ref[...]        # [1, TM]  f32
    tv = t_ref[...]        # [1, TM]  f32
    w1 = w1_ref[...]       # [10, 2]

    # Layer 1 (in_features = 2): broadcast FMA — fuses the torch.cat entirely.
    h = jnp.tanh(w1[:, 0:1] * xv + w1[:, 1:2] * tv + b1_ref[...])           # [10, TM]
    # Layers 2-3: W[out,in] @ h[in, TM] + b[out,1]
    h = jnp.tanh(jnp.dot(w2_ref[...], h,
                         preferred_element_type=jnp.float32) + b2_ref[...])  # [10, TM]
    h = jnp.tanh(jnp.dot(w3_ref[...], h,
                         preferred_element_type=jnp.float32) + b3_ref[...])  # [10, TM]
    # Layer 4 (no activation)
    o_ref[...] = jnp.dot(w4_ref[...], h,
                         preferred_element_type=jnp.float32) + b4_ref[...]   # [2, TM]


def init_params(key):
    """nn.Linear-style init U(-1/sqrt(fan_in), 1/sqrt(fan_in)).
    Weights kept in PyTorch [out, in] layout; biases stored as [out, 1] columns."""
    dims = [(2, 10), (10, 10), (10, 10), (10, 2)]   # (fan_in, fan_out)
    params = []
    keys = jax.random.split(key, 2 * len(dims))
    for i, (fin, fout) in enumerate(dims):
        bound = 1.0 / jnp.sqrt(jnp.float32(fin))
        w = jax.random.uniform(keys[2 * i], (fout, fin), jnp.float32, -bound, bound)
        b = jax.random.uniform(keys[2 * i + 1], (fout, 1), jnp.float32, -bound, bound)
        params.append((w, b))
    return params


def punn_forward(x, t, params):
    """x: [N, 1] (or [N]), t: [N, 1] (or [N]), any float dtype.
    Returns (out0 [N], out1 [N]) float32 — matches torch (x[:,0], x[:,1])."""
    N = x.shape[0]
    # [N,1] -> [1,N] is a contiguous reshape (free), giving the lane-dense layout.
    x_row = jnp.asarray(x, jnp.float32).reshape(1, -1)
    t_row = jnp.asarray(t, jnp.float32).reshape(1, -1)

    TM = min(TM_MAX, _round_up(max(N, 1), 128))
    N_pad = _round_up(N, TM)
    if N_pad != N:
        x_row = jnp.pad(x_row, ((0, 0), (0, N_pad - N)))
        t_row = jnp.pad(t_row, ((0, 0), (0, N_pad - N)))
    grid = (N_pad // TM,)

    flat_params = []
    for w, b in params:
        flat_params.extend([w, b])

    data_spec = pl.BlockSpec((1, TM), lambda i: (0, i))
    # Weights/biases: full blocks with a constant index_map -> stay resident in VMEM.
    weight_specs = [pl.BlockSpec(p.shape, lambda i: (0, 0)) for p in flat_params]

    out = pl.pallas_call(
        punn_kernel,
        out_shape=jax.ShapeDtypeStruct((2, N_pad), jnp.float32),
        grid=grid,
        in_specs=[data_spec, data_spec] + weight_specs,
        out_specs=pl.BlockSpec((2, TM), lambda i: (0, i)),
        compiler_params=pltpu.CompilerParams(
            dimension_semantics=("parallel",)),
    )(x_row, t_row, *flat_params)

    return out[0, :N], out[1, :N]


def punn_reference(x, t, params):
    """Plain-JAX reference in the original [N, F] layout."""
    h = jnp.concatenate([jnp.asarray(x, jnp.float32).reshape(-1, 1),
                         jnp.asarray(t, jnp.float32).reshape(-1, 1)], axis=1)
    for i, (w, b) in enumerate(params):
        h = h @ w.T + b.reshape(1, -1)
        if i < 3:
            h = jnp.tanh(h)
    return h[:, 0], h[:, 1]


if __name__ == "__main__":
    key = jax.random.PRNGKey(0)
    k_param, k_x, k_t = jax.random.split(key, 3)

    params = init_params(k_param)

    for N in (8, 300):
        kx, kt = jax.random.fold_in(k_x, N), jax.random.fold_in(k_t, N)
        x = jax.random.normal(kx, (N, 1), jnp.float32)
        t = jax.random.normal(kt, (N, 1), jnp.float32)

        out0, out1 = punn_forward(x, t, params)
        jax.block_until_ready((out0, out1))

        ref0, ref1 = punn_reference(x, t, params)
        assert out0.shape == (N,) and out1.shape == (N,)
        assert jnp.allclose(out0, ref0, atol=1e-5, rtol=1e-5)
        assert jnp.allclose(out1, ref1, atol=1e-5, rtol=1e-5)

    print("KERNEL_OK")
</pallas_src>

<mosaic_0001>
module attributes {stable_mosaic.version = 11 : i64} {
  func.func @punn_kernel(%arg0: i32, %arg1: memref<1x128xf32, #tpu.memory_space<vmem>>, %arg2: memref<1x128xf32, #tpu.memory_space<vmem>>, %arg3: memref<10x2xf32, #tpu.memory_space<vmem>>, %arg4: memref<10x1xf32, #tpu.memory_space<vmem>>, %arg5: memref<10x10xf32, #tpu.memory_space<vmem>>, %arg6: memref<10x1xf32, #tpu.memory_space<vmem>>, %arg7: memref<10x10xf32, #tpu.memory_space<vmem>>, %arg8: memref<10x1xf32, #tpu.memory_space<vmem>>, %arg9: memref<2x10xf32, #tpu.memory_space<vmem>>, %arg10: memref<2x1xf32, #tpu.memory_space<vmem>>, %arg11: memref<2x128xf32, #tpu.memory_space<vmem>>) attributes {dimension_semantics = [#tpu.dimension_semantics<parallel>], iteration_bounds = array<i64: 1>, scalar_prefetch = 0 : i64, scratch_operands = 0 : i64, tpu.core_type = #tpu.core_type<tc>, window_params = [{transform_indices = @transform_0, window_bounds = array<i64: 1, 128>}, {transform_indices = @transform_1, window_bounds = array<i64: 1, 128>}, {pipeline_mode = #tpu.pipeline_mode<synchronous>, transform_indices = @transform_2, window_bounds = array<i64: 10, 2>}, {pipeline_mode = #tpu.pipeline_mode<synchronous>, transform_indices = @transform_3, window_bounds = array<i64: 10, 1>}, {pipeline_mode = #tpu.pipeline_mode<synchronous>, transform_indices = @transform_4, window_bounds = array<i64: 10, 10>}, {pipeline_mode = #tpu.pipeline_mode<synchronous>, transform_indices = @transform_5, window_bounds = array<i64: 10, 1>}, {pipeline_mode = #tpu.pipeline_mode<synchronous>, transform_indices = @transform_6, window_bounds = array<i64: 10, 10>}, {pipeline_mode = #tpu.pipeline_mode<synchronous>, transform_indices = @transform_7, window_bounds = array<i64: 10, 1>}, {pipeline_mode = #tpu.pipeline_mode<synchronous>, transform_indices = @transform_8, window_bounds = array<i64: 2, 10>}, {pipeline_mode = #tpu.pipeline_mode<synchronous>, transform_indices = @transform_9, window_bounds = array<i64: 2, 1>}, {transform_indices = @transform_10, window_bounds = array<i64: 2, 128>}]} {
    %c0 = arith.constant 0 : index
    %c0_0 = arith.constant 0 : index
    %0 = vector.load %arg1[%c0, %c0_0] : memref<1x128xf32, #tpu.memory_space<vmem>>, vector<1x128xf32>
    %c0_1 = arith.constant 0 : index
    %c0_2 = arith.constant 0 : index
    %1 = vector.load %arg2[%c0_1, %c0_2] : memref<1x128xf32, #tpu.memory_space<vmem>>, vector<1x128xf32>
    %c0_3 = arith.constant 0 : index
    %c0_4 = arith.constant 0 : index
    %2 = vector.load %arg3[%c0_3, %c0_4] : memref<10x2xf32, #tpu.memory_space<vmem>>, vector<10x2xf32>
    %3 = vector.extract_strided_slice %2 {offsets = [0, 0], sizes = [10, 1], strides = [1, 1]} : vector<10x2xf32> to vector<10x1xf32>
    %4 = vector.broadcast %3 : vector<10x1xf32> to vector<10x128xf32>
    %5 = vector.broadcast %0 : vector<1x128xf32> to vector<10x128xf32>
    %6 = arith.mulf %4, %5 : vector<10x128xf32>
    %7 = vector.extract_strided_slice %2 {offsets = [0, 1], sizes = [10, 1], strides = [1, 1]} : vector<10x2xf32> to vector<10x1xf32>
    %8 = vector.broadcast %7 : vector<10x1xf32> to vector<10x128xf32>
    %9 = vector.broadcast %1 : vector<1x128xf32> to vector<10x128xf32>
    %10 = arith.mulf %8, %9 : vector<10x128xf32>
    %11 = arith.addf %6, %10 : vector<10x128xf32>
    %c0_5 = arith.constant 0 : index
    %c0_6 = arith.constant 0 : index
    %12 = vector.load %arg4[%c0_5, %c0_6] : memref<10x1xf32, #tpu.memory_space<vmem>>, vector<10x1xf32>
    %13 = vector.broadcast %12 : vector<10x1xf32> to vector<10x128xf32>
    %14 = arith.addf %11, %13 : vector<10x128xf32>
    %15 = math.tanh %14 : vector<10x128xf32>
    %c0_7 = arith.constant 0 : index
    %c0_8 = arith.constant 0 : index
    %16 = vector.load %arg5[%c0_7, %c0_8] : memref<10x10xf32, #tpu.memory_space<vmem>>, vector<10x10xf32>
    %cst = arith.constant dense<0.000000e+00> : vector<10x128xf32>
    %17 = tpu.matmul %16, %15, %cst {dimension_numbers = #tpu.dot_dimension_numbers<[1], [0], [0], [1], [0, 0, 1, 1], [], []>} : vector<10x10xf32>, vector<10x128xf32>, vector<10x128xf32> -> vector<10x128xf32>
    %c0_9 = arith.constant 0 : index
    %c0_10 = arith.constant 0 : index
    %18 = vector.load %arg6[%c0_9, %c0_10] : memref<10x1xf32, #tpu.memory_space<vmem>>, vector<10x1xf32>
    %19 = vector.broadcast %18 : vector<10x1xf32> to vector<10x128xf32>
    %20 = arith.addf %17, %19 : vector<10x128xf32>
    %21 = math.tanh %20 : vector<10x128xf32>
    %c0_11 = arith.constant 0 : index
    %c0_12 = arith.constant 0 : index
    %22 = vector.load %arg7[%c0_11, %c0_12] : memref<10x10xf32, #tpu.memory_space<vmem>>, vector<10x10xf32>
    %cst_13 = arith.constant dense<0.000000e+00> : vector<10x128xf32>
    %23 = tpu.matmul %22, %21, %cst_13 {dimension_numbers = #tpu.dot_dimension_numbers<[1], [0], [0], [1], [0, 0, 1, 1], [], []>} : vector<10x10xf32>, vector<10x128xf32>, vector<10x128xf32> -> vector<10x128xf32>
    %c0_14 = arith.constant 0 : index
    %c0_15 = arith.constant 0 : index
    %24 = vector.load %arg8[%c0_14, %c0_15] : memref<10x1xf32, #tpu.memory_space<vmem>>, vector<10x1xf32>
    %25 = vector.broadcast %24 : vector<10x1xf32> to vector<10x128xf32>
    %26 = arith.addf %23, %25 : vector<10x128xf32>
    %27 = math.tanh %26 : vector<10x128xf32>
    %c0_16 = arith.constant 0 : index
    %c0_17 = arith.constant 0 : index
    %28 = vector.load %arg9[%c0_16, %c0_17] : memref<2x10xf32, #tpu.memory_space<vmem>>, vector<2x10xf32>
    %cst_18 = arith.constant dense<0.000000e+00> : vector<2x128xf32>
    %29 = tpu.matmul %28, %27, %cst_18 {dimension_numbers = #tpu.dot_dimension_numbers<[1], [0], [0], [1], [0, 0, 1, 1], [], []>} : vector<2x10xf32>, vector<10x128xf32>, vector<2x128xf32> -> vector<2x128xf32>
    %c0_19 = arith.constant 0 : index
    %c0_20 = arith.constant 0 : index
    %30 = vector.load %arg10[%c0_19, %c0_20] : memref<2x1xf32, #tpu.memory_space<vmem>>, vector<2x1xf32>
    %31 = vector.broadcast %30 : vector<2x1xf32> to vector<2x128xf32>
    %32 = arith.addf %29, %31 : vector<2x128xf32>
    %c0_21 = arith.constant 0 : index
    %c0_22 = arith.constant 0 : index
    %33 = vector.load %arg11[%c0_21, %c0_22] : memref<2x128xf32, #tpu.memory_space<vmem>>, vector<2x128xf32>
    tpu.vector_store %arg11[%c0_21, %c0_22], %32 {strides = array<i32>} : memref<2x128xf32, #tpu.memory_space<vmem>>, vector<2x128xf32>,
    return
  }
  func.func @transform_0(%arg0: i32) -> (i32, i32) {
    %c0_i32 = arith.constant 0 : i32
    %c0_i32_0 = arith.constant 0 : i32
    return %c0_i32, %arg0 : i32, i32
  }
  func.func @transform_1(%arg0: i32) -> (i32, i32) {
    %c0_i32 = arith.constant 0 : i32
    %c0_i32_0 = arith.constant 0 : i32
    return %c0_i32, %arg0 : i32, i32
  }
  func.func @transform_2(%arg0: i32) -> (i32, i32) {
    %c0_i32 = arith.constant 0 : i32
    %c0_i32_0 = arith.constant 0 : i32
    %c0_i32_1 = arith.constant 0 : i32
    return %c0_i32, %c0_i32_0 : i32, i32
  }
  func.func @transform_3(%arg0: i32) -> (i32, i32) {
    %c0_i32 = arith.constant 0 : i32
    %c0_i32_0 = arith.constant 0 : i32
    %c0_i32_1 = arith.constant 0 : i32
    return %c0_i32, %c0_i32_0 : i32, i32
  }
  func.func @transform_4(%arg0: i32) -> (i32, i32) {
    %c0_i32 = arith.constant 0 : i32
    %c0_i32_0 = arith.constant 0 : i32
    %c0_i32_1 = arith.constant 0 : i32
    return %c0_i32, %c0_i32_0 : i32, i32
  }
  func.func @transform_5(%arg0: i32) -> (i32, i32) {
    %c0_i32 = arith.constant 0 : i32
    %c0_i32_0 = arith.constant 0 : i32
    %c0_i32_1 = arith.constant 0 : i32
    return %c0_i32, %c0_i32_0 : i32, i32
  }
  func.func @transform_6(%arg0: i32) -> (i32, i32) {
    %c0_i32 = arith.constant 0 : i32
    %c0_i32_0 = arith.constant 0 : i32
    %c0_i32_1 = arith.constant 0 : i32
    return %c0_i32, %c0_i32_0 : i32, i32
  }
  func.func @transform_7(%arg0: i32) -> (i32, i32) {
    %c0_i32 = arith.constant 0 : i32
    %c0_i32_0 = arith.constant 0 : i32
    %c0_i32_1 = arith.constant 0 : i32
    return %c0_i32, %c0_i32_0 : i32, i32
  }
  func.func @transform_8(%arg0: i32) -> (i32, i32) {
    %c0_i32 = arith.constant 0 : i32
    %c0_i32_0 = arith.constant 0 : i32
    %c0_i32_1 = arith.constant 0 : i32
    return %c0_i32, %c0_i32_0 : i32, i32
  }
  func.func @transform_9(%arg0: i32) -> (i32, i32) {
    %c0_i32 = arith.constant 0 : i32
    %c0_i32_0 = arith.constant 0 : i32
    %c0_i32_1 = arith.constant 0 : i32
    return %c0_i32, %c0_i32_0 : i32, i32
  }
  func.func @transform_10(%arg0: i32) -> (i32, i32) {
    %c0_i32 = arith.constant 0 : i32
    %c0_i32_0 = arith.constant 0 : i32
    return %c0_i32, %arg0 : i32, i32
  }
}

</mosaic_0001>

<llo_original>
// kernel: tpu_custom_call.1
$region0: #{tpu_custom_call.1}
  #allocation0 [shape = 'u32[]', space=smem, size = 0x4, offset = 0x4, fixed_abs, tag = 'smem constant byte address 0x4 - core index']
  #allocation1 [shape = 'u32[144,128]{1,0:T(1,128)}', space=vmem, size = 0x12000, scoped, tag = 'internal scratch']
  %s0 = inlined_call_operand.vmem [shape: f32[1,128], index: 0, kind: input, shape index: {}]
  %s1 = inlined_call_operand.vmem [shape: f32[1,128], index: 1, kind: input, shape index: {}]
  %s2 = inlined_call_operand.vmem [shape: f32[10,2], index: 2, kind: input, shape index: {}]
  %s3 = inlined_call_operand.vmem [shape: f32[10,1], index: 3, kind: input, shape index: {}]
  %s4 = inlined_call_operand.vmem [shape: f32[10,10], index: 4, kind: input, shape index: {}]
  %s5 = inlined_call_operand.vmem [shape: f32[10,1], index: 5, kind: input, shape index: {}]
  %s6 = inlined_call_operand.vmem [shape: f32[10,10], index: 6, kind: input, shape index: {}]
  %s7 = inlined_call_operand.vmem [shape: f32[10,1], index: 7, kind: input, shape index: {}]
  %s8 = inlined_call_operand.vmem [shape: f32[2,10], index: 8, kind: input, shape index: {}]
  %s9 = inlined_call_operand.vmem [shape: f32[2,1], index: 9, kind: input, shape index: {}]
  %s10 = inlined_call_operand.hbm [shape: f32[2,128], index: 10, kind: output, shape index: {}]
  %s11 = sld [smem:[#allocation0]]
  $region50: #{tpu_custom_call.1} parent=0
    _
  %s13 = ssub.s32 1, %s11
  %s14 = scalar_select 0, %s13, %s11
  $region1: #{tpu_custom_call.1} parent=0
    #allocation2 [shape = 'u8[1024]{0}', space=vmem, size = 0x400, scoped, tag = 'output window, operand 0, single buffered']
    #allocation3 [shape = 's32[1]{0}', space=sflag, size = 0x4, scoped, tag = 'scoped memory for tpu_custom_call.1']
    %15 = vsyncpa [#allocation3], 0
    // Predicated region
    $region2: #{tpu_custom_call.1} parent=1 // pred_check
      _
    $region3: #{tpu_custom_call.1} parent=1 // pred_check_branch
      %17 = sbr.rel (0) target = $region5
    $region4: #{tpu_custom_call.1} parent=1 // pred_region
      _
    $region5: #{tpu_custom_call.1} parent=1 // pred_fallthru
      _
    // Predicated region
    $region6: #{tpu_custom_call.1} parent=1 // pred_check
      _
    $region7: #{tpu_custom_call.1} parent=1 // pred_check_branch
      %19 = sbr.rel (0) target = $region9
    $region8: #{tpu_custom_call.1} parent=1 // pred_region
      _
    $region9: #{tpu_custom_call.1} parent=1 // pred_fallthru
      _
    // Predicated region
    $region10: #{tpu_custom_call.1} parent=1 // pred_check
      _
    $region11: #{tpu_custom_call.1} parent=1 // pred_check_branch
      %21 = sbr.rel (0) target = $region13
    $region12: #{tpu_custom_call.1} parent=1 // pred_region
      _
    $region13: #{tpu_custom_call.1} parent=1 // pred_fallthru
      _
    // Predicated region
    $region14: #{tpu_custom_call.1} parent=1 // pred_check
      _
    $region15: #{tpu_custom_call.1} parent=1 // pred_check_branch
      %23 = sbr.rel (0) target = $region17
    $region16: #{tpu_custom_call.1} parent=1 // pred_region
      _
    $region17: #{tpu_custom_call.1} parent=1 // pred_fallthru
      _
    // Predicated region
    $region18: #{tpu_custom_call.1} parent=1 // pred_check
      _
    $region19: #{tpu_custom_call.1} parent=1 // pred_check_branch
      %25 = sbr.rel (0) target = $region21
    $region20: #{tpu_custom_call.1} parent=1 // pred_region
      _
    $region21: #{tpu_custom_call.1} parent=1 // pred_fallthru
      _
    // Predicated region
    $region22: #{tpu_custom_call.1} parent=1 // pred_check
      _
    $region23: #{tpu_custom_call.1} parent=1 // pred_check_branch
      %27 = sbr.rel (0) target = $region25
    $region24: #{tpu_custom_call.1} parent=1 // pred_region
      _
    $region25: #{tpu_custom_call.1} parent=1 // pred_fallthru
      _
    // Predicated region
    $region26: #{tpu_custom_call.1} parent=1 // pred_check
      _
    $region27: #{tpu_custom_call.1} parent=1 // pred_check_branch
      %29 = sbr.rel (0) target = $region29
    $region28: #{tpu_custom_call.1} parent=1 // pred_region
      _
    $region29: #{tpu_custom_call.1} parent=1 // pred_fallthru
      _
    // Predicated region
    $region30: #{tpu_custom_call.1} parent=1 // pred_check
      _
    $region31: #{tpu_custom_call.1} parent=1 // pred_check_branch
      %31 = sbr.rel (0) target = $region33
    $region32: #{tpu_custom_call.1} parent=1 // pred_region
      _
    $region33: #{tpu_custom_call.1} parent=1 // pred_fallthru
      _
    // Predicated region
    $region34: #{tpu_custom_call.1} parent=1 // pred_check
      _
    $region35: #{tpu_custom_call.1} parent=1 // pred_check_branch
      %33 = sbr.rel (0) target = $region37
    $region36: #{tpu_custom_call.1} parent=1 // pred_region
      _
    $region37: #{tpu_custom_call.1} parent=1 // pred_fallthru
      _
    // Predicated region
    $region38: #{tpu_custom_call.1} parent=1 // pred_check
      _
    $region39: #{tpu_custom_call.1} parent=1 // pred_check_branch
      %35 = sbr.rel (0) target = $region41
    $region40: #{tpu_custom_call.1} parent=1 // pred_region
      _
    $region41: #{tpu_custom_call.1} parent=1 // pred_fallthru
      _
    %v36 = vld [vmem:[%s0] sm:$0x1]
    %v37 = vld [vmem:[%s1] sm:$0x1]
    %v38 = vld [vmem:[%s2] sm:$0xff]
    %v39 = vld [vmem:[%s2 + $0x8] sm:$0x3]
    %41 = vset.pattern.permute.xlu0 0
    %42 = vperm.xlu0 %41, %v38
    %v43 = vpop.permute.xlu0 %42
    %46 = vset.pattern.permute.xlu0 0
    %47 = vperm.xlu0 %46, %v39
    %v48 = vpop.permute.xlu0 %47
    %v51 = vlaneseq
    %v52 = vshrl.u32 %v51, 7
    %v53 = vsub.s32 0, %v52
    %v54 = vrot.slane %v36, %v53
    %v56 = vmul.f32 %v43, %v54
    %v57 = vmul.f32 %v48, %v54
    %58 = vset.pattern.permute.xlu0 1
    %59 = vperm.xlu0 %58, %v38
    %v60 = vpop.permute.xlu0 %59
    %62 = vset.pattern.permute.xlu0 1
    %63 = vperm.xlu0 %62, %v39
    %v64 = vpop.permute.xlu0 %63
    %v67 = vlaneseq
    %v68 = vshrl.u32 %v67, 7
    %v69 = vsub.s32 0, %v68
    %v70 = vrot.slane %v37, %v69
    %v72 = vmul.f32 %v60, %v70
    %v73 = vmul.f32 %v64, %v70
    %v74 = vadd.f32 %v56, %v72
    %v75 = vadd.f32 %v57, %v73
    %v76 = vld [vmem:[%s3] sm:$0xff]
    %v77 = vld [vmem:[%s3 + $0x8] sm:$0x3]
    %79 = vset.pattern.permute.xlu0 0
    %80 = vperm.xlu0 %79, %v76
    %v81 = vpop.permute.xlu0 %80
    %84 = vset.pattern.permute.xlu0 0
    %85 = vperm.xlu0 %84, %v77
    %v86 = vpop.permute.xlu0 %85
    %v88 = vadd.f32 %v74, %v81
    %v89 = vadd.f32 %v75, %v86
    %v90 = vtanh.pop %v88
    %v91 = vtanh.pop %v89
    %v92 = vld [vmem:[%s4] sm:$0xff]
    %v93 = vld [vmem:[%s4 + $0x8] sm:$0x3]
    %v94 = vld [vmem:[%s5] sm:$0xff]
    %v95 = vld [vmem:[%s5 + $0x8] sm:$0x3]
    %97 = vset.pattern.permute.xlu0 0
    %98 = vperm.xlu0 %97, %v94
    %v99 = vpop.permute.xlu0 %98
    %102 = vset.pattern.permute.xlu0 0
    %103 = vperm.xlu0 %102, %v95
    %v104 = vpop.permute.xlu0 %103
    %vm106 = vcmask 80896
    %v108 = vsel %vm106, %v92, 0
    %v111 = vsel %vm106, %v93, 0
    %vm113 = vcmask 1041408
    %v115 = vsel %vm113, %v91, 0
    %117 = vmatprep.subr.mxu0 0.0
    %118 = vmatpush1.msra.mxu0 %v90
    %119 = vmatprep.subr.mxu0 0.0
    %120 = vmatpush1.msra.mxu0 %v115
    %121 = vmatprep.subr.mxu0 0.0
    %122 = vmatpush1.msra.mxu0 0.0
    %123 = vmatprep.subr.mxu0 0.0
    %124 = vmatpush1.msra.mxu0 0.0
    %125 = vmatprep.subr.mxu0 0.0
    %126 = vmatpush1.msra.mxu0 0.0
    %127 = vmatprep.subr.mxu0 0.0
    %128 = vmatpush1.msra.mxu0 0.0
    %129 = vmatprep.subr.mxu0 0.0
    %130 = vmatpush1.msra.mxu0 0.0
    %131 = vmatprep.subr.mxu0 0.0
    %132 = vmatpush1.msra.mxu0 0.0
    %133 = vmatprep.subr.mxu0 0.0
    %134 = vmatpush1.msra.mxu0 0.0
    %135 = vmatprep.subr.mxu0 0.0
    %136 = vmatpush1.msra.mxu0 0.0
    %137 = vmatprep.subr.mxu0 0.0
    %138 = vmatpush1.msra.mxu0 0.0
    %139 = vmatprep.subr.mxu0 0.0
    %140 = vmatpush1.msra.mxu0 0.0
    %141 = vmatprep.subr.mxu0 0.0
    %142 = vmatpush1.msra.mxu0 0.0
    %143 = vmatprep.subr.mxu0 0.0
    %144 = vmatpush1.msra.mxu0 0.0
    %145 = vmatprep.subr.mxu0 0.0
    %146 = vmatpush1.msra.mxu0 0.0
    %147 = vmatprep.subr.mxu0 0.0
    %148 = vmatpush1.msra.mxu0 0.0
    %149 = vmatprep.subr.mxu0 0.0
    %150 = vmatpush1.msra.mxu0 0.0
    %151 = vmatprep.subr.mxu0 0.0
    %152 = vmatpush1.msra.mxu0 0.0
    %153 = vmatprep.subr.mxu0 0.0
    %154 = vmatpush1.msra.mxu0 0.0
    %155 = vmatprep.subr.mxu0 0.0
    %156 = vmatpush1.msra.mxu0 0.0
    %157 = vmatprep.subr.mxu0 0.0
    %158 = vmatpush1.msra.mxu0 0.0
    %159 = vmatprep.subr.mxu0 0.0
    %160 = vmatpush1.msra.mxu0 0.0
    %161 = vmatprep.subr.mxu0 0.0
    %162 = vmatpush1.msra.mxu0 0.0
    %163 = vmatprep.subr.mxu0 0.0
    %164 = vmatpush1.msra.mxu0 0.0
    %165 = vmatprep.subr.mxu0 0.0
    %166 = vmatpush1.msra.mxu0 0.0
    %167 = vmatprep.subr.mxu0 0.0
    %168 = vmatpush1.msra.mxu0 0.0
    %169 = vmatprep.subr.mxu0 0.0
    %170 = vmatpush1.msra.mxu0 0.0
    %171 = vmatprep.subr.mxu0 0.0
    %172 = vmatpush1.msra.mxu0 0.0
    %173 = vmatprep.subr.mxu0 0.0
    %174 = vmatpush1.msra.mxu0 0.0
    %175 = vmatprep.subr.mxu0 0.0
    %176 = vmatpush1.msra.mxu0 0.0
    %177 = vmatprep.subr.mxu0 0.0
    %178 = vmatpush1.msra.mxu0 0.0
    %179 = vmatprep.subr.mxu0 0.0
    %180 = vmatpush1.msra.mxu0 0.0
    %181 = vmatprep.mubr.f32.mxu0 0.0
    %182 = vmatmul.mubr.f32.gmra.mrb[0].mxu0 %v108
    %v183 = vpop.f32.mrb[0].mxu0
    %v184 = vadd.f32 %v99, %v183
    %v185 = vpop.f32.mrb[0].mxu0
    %186 = vmatprep.mubr.f32.mxu0 0.0
    %187 = vmatmul.mubr.f32.gmra.mrb[0].mxu0 %v111
    %v188 = vpop.f32.mrb[0].mxu0
    %v189 = vadd.f32 %v104, %v188
    %v190 = vpop.f32.mrb[0].mxu0
    %191 = vdwg.mxu0
    %v192 = vtanh.pop %v184
    %v193 = vtanh.pop %v189
    %v194 = vld [vmem:[%s6] sm:$0xff]
    %v195 = vld [vmem:[%s6 + $0x8] sm:$0x3]
    %v196 = vld [vmem:[%s7] sm:$0xff]
    %v197 = vld [vmem:[%s7 + $0x8] sm:$0x3]
    %199 = vset.pattern.permute.xlu0 0
    %200 = vperm.xlu0 %199, %v196
    %v201 = vpop.permute.xlu0 %200
    %204 = vset.pattern.permute.xlu0 0
    %205 = vperm.xlu0 %204, %v197
    %v206 = vpop.permute.xlu0 %205
    %v209 = vsel %vm106, %v194, 0
    %v212 = vsel %vm106, %v195, 0
    %v215 = vsel %vm113, %v193, 0
    %217 = vmatprep.subr.mxu0 0.0
    %218 = vmatpush1.msra.mxu0 %v192
    %219 = vmatprep.subr.mxu0 0.0
    %220 = vmatpush1.msra.mxu0 %v215
    %221 = vmatprep.subr.mxu0 0.0
    %222 = vmatpush1.msra.mxu0 0.0
    %223 = vmatprep.subr.mxu0 0.0
    %224 = vmatpush1.msra.mxu0 0.0
    %225 = vmatprep.subr.mxu0 0.0
    %226 = vmatpush1.msra.mxu0 0.0
    %227 = vmatprep.subr.mxu0 0.0
    %228 = vmatpush1.msra.mxu0 0.0
    %229 = vmatprep.subr.mxu0 0.0
    %230 = vmatpush1.msra.mxu0 0.0
    %231 = vmatprep.subr.mxu0 0.0
    %232 = vmatpush1.msra.mxu0 0.0
    %233 = vmatprep.subr.mxu0 0.0
    %234 = vmatpush1.msra.mxu0 0.0
    %235 = vmatprep.subr.mxu0 0.0
    %236 = vmatpush1.msra.mxu0 0.0
    %237 = vmatprep.subr.mxu0 0.0
    %238 = vmatpush1.msra.mxu0 0.0
    %239 = vmatprep.subr.mxu0 0.0
    %240 = vmatpush1.msra.mxu0 0.0
    %241 = vmatprep.subr.mxu0 0.0
    %242 = vmatpush1.msra.mxu0 0.0
    %243 = vmatprep.subr.mxu0 0.0
    %244 = vmatpush1.msra.mxu0 0.0
    %245 = vmatprep.subr.mxu0 0.0
    %246 = vmatpush1.msra.mxu0 0.0
    %247 = vmatprep.subr.mxu0 0.0
    %248 = vmatpush1.msra.mxu0 0.0
    %249 = vmatprep.subr.mxu0 0.0
    %250 = vmatpush1.msra.mxu0 0.0
    %251 = vmatprep.subr.mxu0 0.0
    %252 = vmatpush1.msra.mxu0 0.0
    %253 = vmatprep.subr.mxu0 0.0
    %254 = vmatpush1.msra.mxu0 0.0
    %255 = vmatprep.subr.mxu0 0.0
    %256 = vmatpush1.msra.mxu0 0.0
    %257 = vmatprep.subr.mxu0 0.0
    %258 = vmatpush1.msra.mxu0 0.0
    %259 = vmatprep.subr.mxu0 0.0
    %260 = vmatpush1.msra.mxu0 0.0
    %261 = vmatprep.subr.mxu0 0.0
    %262 = vmatpush1.msra.mxu0 0.0
    %263 = vmatprep.subr.mxu0 0.0
    %264 = vmatpush1.msra.mxu0 0.0
    %265 = vmatprep.subr.mxu0 0.0
    %266 = vmatpush1.msra.mxu0 0.0
    %267 = vmatprep.subr.mxu0 0.0
    %268 = vmatpush1.msra.mxu0 0.0
    %269 = vmatprep.subr.mxu0 0.0
    %270 = vmatpush1.msra.mxu0 0.0
    %271 = vmatprep.subr.mxu0 0.0
    %272 = vmatpush1.msra.mxu0 0.0
    %273 = vmatprep.subr.mxu0 0.0
    %274 = vmatpush1.msra.mxu0 0.0
    %275 = vmatprep.subr.mxu0 0.0
    %276 = vmatpush1.msra.mxu0 0.0
    %277 = vmatprep.subr.mxu0 0.0
    %278 = vmatpush1.msra.mxu0 0.0
    %279 = vmatprep.subr.mxu0 0.0
    %280 = vmatpush1.msra.mxu0 0.0
    %281 = vmatprep.mubr.f32.mxu0 0.0
    %282 = vmatmul.mubr.f32.gmra.mrb[0].mxu0 %v209
    %v283 = vpop.f32.mrb[0].mxu0
    %v284 = vadd.f32 %v201, %v283
    %v285 = vpop.f32.mrb[0].mxu0
    %286 = vmatprep.mubr.f32.mxu0 0.0
    %287 = vmatmul.mubr.f32.gmra.mrb[0].mxu0 %v212
    %v288 = vpop.f32.mrb[0].mxu0
    %v289 = vadd.f32 %v206, %v288
    %v290 = vpop.f32.mrb[0].mxu0
    %291 = vdwg.mxu0
    %v292 = vtanh.pop %v284
    %v293 = vtanh.pop %v289
    %v294 = vld [vmem:[%s8] sm:$0x3]
    %v295 = vld [vmem:[%s9] sm:$0x3]
    %297 = vset.pattern.permute.xlu0 0
    %298 = vperm.xlu0 %297, %v295
    %v299 = vpop.permute.xlu0 %298
    %v302 = vsel %vm106, %v294, 0
    %v305 = vsel %vm113, %v293, 0
    %307 = vmatprep.subr.mxu0 0.0
    %308 = vmatpush1.msra.mxu0 %v292
    %309 = vmatprep.subr.mxu0 0.0
    %310 = vmatpush1.msra.mxu0 %v305
    %311 = vmatprep.subr.mxu0 0.0
    %312 = vmatpush1.msra.mxu0 0.0
    %313 = vmatprep.subr.mxu0 0.0
    %314 = vmatpush1.msra.mxu0 0.0
    %315 = vmatprep.subr.mxu0 0.0
    %316 = vmatpush1.msra.mxu0 0.0
    %317 = vmatprep.subr.mxu0 0.0
    %318 = vmatpush1.msra.mxu0 0.0
    %319 = vmatprep.subr.mxu0 0.0
    %320 = vmatpush1.msra.mxu0 0.0
    %321 = vmatprep.subr.mxu0 0.0
    %322 = vmatpush1.msra.mxu0 0.0
    %323 = vmatprep.subr.mxu0 0.0
    %324 = vmatpush1.msra.mxu0 0.0
    %325 = vmatprep.subr.mxu0 0.0
    %326 = vmatpush1.msra.mxu0 0.0
    %327 = vmatprep.subr.mxu0 0.0
    %328 = vmatpush1.msra.mxu0 0.0
    %329 = vmatprep.subr.mxu0 0.0
    %330 = vmatpush1.msra.mxu0 0.0
    %331 = vmatprep.subr.mxu0 0.0
    %332 = vmatpush1.msra.mxu0 0.0
    %333 = vmatprep.subr.mxu0 0.0
    %334 = vmatpush1.msra.mxu0 0.0
    %335 = vmatprep.subr.mxu0 0.0
    %336 = vmatpush1.msra.mxu0 0.0
    %337 = vmatprep.subr.mxu0 0.0
    %338 = vmatpush1.msra.mxu0 0.0
    %339 = vmatprep.subr.mxu0 0.0
    %340 = vmatpush1.msra.mxu0 0.0
    %341 = vmatprep.subr.mxu0 0.0
    %342 = vmatpush1.msra.mxu0 0.0
    %343 = vmatprep.subr.mxu0 0.0
    %344 = vmatpush1.msra.mxu0 0.0
    %345 = vmatprep.subr.mxu0 0.0
    %346 = vmatpush1.msra.mxu0 0.0
    %347 = vmatprep.subr.mxu0 0.0
    %348 = vmatpush1.msra.mxu0 0.0
    %349 = vmatprep.subr.mxu0 0.0
    %350 = vmatpush1.msra.mxu0 0.0
    %351 = vmatprep.subr.mxu0 0.0
    %352 = vmatpush1.msra.mxu0 0.0
    %353 = vmatprep.subr.mxu0 0.0
    %354 = vmatpush1.msra.mxu0 0.0
    %355 = vmatprep.subr.mxu0 0.0
    %356 = vmatpush1.msra.mxu0 0.0
    %357 = vmatprep.subr.mxu0 0.0
    %358 = vmatpush1.msra.mxu0 0.0
    %359 = vmatprep.subr.mxu0 0.0
    %360 = vmatpush1.msra.mxu0 0.0
    %361 = vmatprep.subr.mxu0 0.0
    %362 = vmatpush1.msra.mxu0 0.0
    %363 = vmatprep.subr.mxu0 0.0
    %364 = vmatpush1.msra.mxu0 0.0
    %365 = vmatprep.subr.mxu0 0.0
    %366 = vmatpush1.msra.mxu0 0.0
    %367 = vmatprep.subr.mxu0 0.0
    %368 = vmatpush1.msra.mxu0 0.0
    %369 = vmatprep.subr.mxu0 0.0
    %370 = vmatpush1.msra.mxu0 0.0
    %371 = vmatprep.mubr.f32.mxu0 0.0
    %372 = vmatmul.mubr.f32.gmra.mrb[0].mxu0 %v302
    %v373 = vpop.f32.mrb[0].mxu0
    %v374 = vadd.f32 %v299, %v373
    %v375 = vpop.f32.mrb[0].mxu0
    %376 = vdwg.mxu0
    %377 = vst [vmem:[#allocation2] sm:$0x3] %v374
    // Predicated region
    $region42: #{tpu_custom_call.1} parent=1 // pred_check
      _
    $region43: #{tpu_custom_call.1} parent=1 // pred_check_branch
      %379 = sbr.rel (0) target = $region45
    $region44: #{tpu_custom_call.1} parent=1 // pred_region
      %s381 = ssub.s32 32, 32
      %382 = vsyncadd [#allocation3], %s381
      %s384 = sshll.u32 [#allocation2], 4
      %s385 = int_to_ptr.vmem [resolvable:$true] %s384
      %387 = dma.vmem_to_hbm [thread:$0]  %s385, 32, %s10, [#allocation3]
    $region45: #{tpu_custom_call.1} parent=1 // pred_fallthru
      _
    // Predicated region
    $region46: #{tpu_custom_call.1} parent=1 // pred_check
      _
    $region47: #{tpu_custom_call.1} parent=1 // pred_check_branch
      %389 = sbr.rel (0) target = $region49
    $region48: #{tpu_custom_call.1} parent=1 // pred_region
      %390 = dma.done [#allocation3], 32
    $region49: #{tpu_custom_call.1} parent=1 // pred_fallthru
      _
    %391 = vsyncpa [#allocation3], 1

</llo_original>
